<compile_context>
chip_gen: v6e
topology: v6e:2x2x1
jax: 0.10.0
libtpu: 0.0.40
codegen_flags: <defaults>
</compile_context>

<pallas_src>
import functools

import jax
import jax.numpy as jnp
from jax.experimental import pallas as pl
from jax.experimental.pallas import tpu as pltpu


def _shift_lanes(x, delta):
    """y[:, t] = x[:, t + delta], zero at the edge (lane slice/concat, no matmul)."""
    c, l = x.shape
    zeros = jnp.zeros((c, abs(delta)), x.dtype)
    if delta > 0:
        return jnp.concatenate([x[:, delta:], zeros], axis=1)
    if delta < 0:
        return jnp.concatenate([zeros, x[:, : l + delta]], axis=1)
    return x


def _place(src, shift, out_len):
    """y[:, s] = src[:, s - shift] when 0 <= s - shift < src_len, else 0 (static shift)."""
    c, l = src.shape
    if shift >= out_len or shift + l <= 0:
        return jnp.zeros((c, out_len), src.dtype)
    lo = max(shift, 0)
    s0 = lo - shift
    n = min(out_len - lo, l - s0)
    pieces = []
    if lo > 0:
        pieces.append(jnp.zeros((c, lo), src.dtype))
    pieces.append(src[:, s0:s0 + n])
    if lo + n < out_len:
        pieces.append(jnp.zeros((c, out_len - lo - n), src.dtype))
    return pieces[0] if len(pieces) == 1 else jnp.concatenate(pieces, axis=1)


def _up_fused_kernel(x1_ref, x2e_ref, x2o_ref, wup_ref, wc_ref, sh1_ref,
                     sh2_ref, alpha_ref, oe_ref, oo_ref, *,
                     L1, L2, Hp, a_shift, dl_parity):
    bt = x1_ref.shape[0]
    chalf = x2e_ref.shape[1]
    a1 = alpha_ref[0]          # PReLU slope of the deconv branch
    a2 = alpha_ref[1]          # PReLU slope of the conv branch

    # ---- ConvTranspose1d(k=3, s=2, p=1): tap-stacked, one bf16 matmul for the
    # whole batch tile.  Result rows [0:half) = even output stream E,
    # rows [half:2*half) = odd output stream D (D[m] = W2@x[m] + W0@x[m+1]).
    x1_parts = []
    for b in range(bt):
        x1b = x1_ref[b]                                       # (Cin, L1) bf16
        x1n = _shift_lanes(x1b, 1)                            # x1[:, m+1], 0 at m=L1-1
        x1_parts.append(jnp.concatenate([x1b, x1n], axis=0))  # (2*Cin, L1)
    x1_cat = x1_parts[0] if bt == 1 else jnp.concatenate(x1_parts, axis=1)
    ed = jnp.dot(wup_ref[...], x1_cat, preferred_element_type=jnp.float32)
    ed = ed + sh1_ref[...]                                    # BN-folded bias
    ed = jnp.where(ed >= 0, ed, a1 * ed)                      # PReLU (f32)

    # ---- Build the conv operands per batch row in the half-resolution /
    # parity layout, then lane-concat across the batch tile so each output
    # parity is ONE lane-dense matmul.
    even_parts = []
    odd_parts = []
    lane1 = jax.lax.broadcasted_iota(jnp.int32, (chalf, L1), 1)
    for b in range(bt):
        e_b = ed[:chalf, b * L1:(b + 1) * L1]
        d_b = ed[chalf:, b * L1:(b + 1) * L1]
        # transposed-conv position 2*L1-1 does not exist -> drop last odd column
        d_b = jnp.where(lane1 == L1 - 1, jnp.zeros_like(d_b), d_b)
        # u at even / odd sequence positions (F.pad offset dl = 2*a_shift + dl_parity)
        if dl_parity == 0:
            ue = _place(e_b, a_shift, Hp)
            uo = _place(d_b, a_shift, Hp)
        else:
            ue = _place(d_b, a_shift + 1, Hp)
            uo = _place(e_b, a_shift, Hp)
        # channel concat z = [x2 ; u] at even / odd positions
        ze = jnp.concatenate([x2e_ref[b], ue.astype(jnp.bfloat16)], axis=0)   # (Cin, Hp)
        zo = jnp.concatenate([x2o_ref[b], uo.astype(jnp.bfloat16)], axis=0)
        if L2 % 2 == 1:   # odd L2: column Hp-1 of the odd stream is padding -> force 0
            laneh = jax.lax.broadcasted_iota(jnp.int32, (2 * chalf, Hp), 1)
            zo = jnp.where(laneh == Hp - 1, jnp.zeros_like(zo), zo)
        zo_m1 = _shift_lanes(zo, -1)                          # z[p-1] for even p
        ze_p1 = _shift_lanes(ze, 1)                           # z[p+1] for odd p
        # tap order [t=0, t=1, t=2] == [z[p-1], z[p], z[p+1]]
        even_parts.append(jnp.concatenate([zo_m1, ze, zo], axis=0))   # (3*Cin, Hp)
        odd_parts.append(jnp.concatenate([ze, zo, ze_p1], axis=0))
    even_cat = even_parts[0] if bt == 1 else jnp.concatenate(even_parts, axis=1)
    odd_cat = odd_parts[0] if bt == 1 else jnp.concatenate(odd_parts, axis=1)

    wc = wc_ref[...]                                          # (Cout, 3*Cin) bf16
    out_e = jnp.dot(wc, even_cat, preferred_element_type=jnp.float32) + sh2_ref[...]
    out_o = jnp.dot(wc, odd_cat, preferred_element_type=jnp.float32) + sh2_ref[...]
    out_e = jnp.where(out_e >= 0, out_e, a2 * out_e)
    out_o = jnp.where(out_o >= 0, out_o, a2 * out_o)
    for b in range(bt):
        oe_ref[b] = out_e[:, b * Hp:(b + 1) * Hp]
        oo_ref[b] = out_o[:, b * Hp:(b + 1) * Hp]


def up_forward(x1, x2, params):
    B, Cin, L1 = x1.shape
    Bx, Chalf, L2 = x2.shape
    assert Bx == B and 2 * Chalf == Cin, (x1.shape, x2.shape)
    Cout = params["w_c"].shape[0]

    Lu = 2 * L1 - 1
    diff = L2 - Lu                      # like F.pad: may be negative (crop)
    dl = diff // 2                      # floor, matches torch's `diff // 2`
    a_shift, dl_parity = dl // 2, dl % 2
    Hp = (L2 + 1) // 2                  # half-resolution (parity) length

    x1b = x1.astype(jnp.bfloat16)
    x2e = x2[:, :, 0::2]
    x2o = x2[:, :, 1::2]
    if x2o.shape[-1] < Hp:              # odd L2: pad the odd stream with one zero column
        x2o = jnp.pad(x2o, ((0, 0), (0, 0), (0, Hp - x2o.shape[-1])))
    x2e = x2e.astype(jnp.bfloat16)
    x2o = x2o.astype(jnp.bfloat16)

    # Batch tile: pack several batch rows per grid step for lane-dense matmuls,
    # but keep >=2 parallel grid steps when B allows it (megacore / v7x 2 TCs).
    bt = max(1, min(B, 256 // max(Hp, 1)))
    while B % bt:
        bt -= 1
    if B > 1 and B // bt < 2:
        bt = max(1, bt // 2)
        while B % bt:
            bt -= 1
    grid = (B // bt,)

    kernel = functools.partial(_up_fused_kernel, L1=L1, L2=L2, Hp=Hp,
                               a_shift=a_shift, dl_parity=dl_parity)

    oe, oo = pl.pallas_call(
        kernel,
        out_shape=(jax.ShapeDtypeStruct((B, Cout, Hp), jnp.float32),
                   jax.ShapeDtypeStruct((B, Cout, Hp), jnp.float32)),
        grid=grid,
        in_specs=[
            pl.BlockSpec((bt, Cin, L1), lambda i: (i, 0, 0)),
            pl.BlockSpec((bt, Chalf, Hp), lambda i: (i, 0, 0)),
            pl.BlockSpec((bt, Chalf, Hp), lambda i: (i, 0, 0)),
            pl.BlockSpec((2 * Chalf, 2 * Cin), lambda i: (0, 0)),
            pl.BlockSpec((Cout, 3 * Cin), lambda i: (0, 0)),
            pl.BlockSpec((2 * Chalf, 1), lambda i: (0, 0)),
            pl.BlockSpec((Cout, 1), lambda i: (0, 0)),
            pl.BlockSpec(memory_space=pltpu.MemorySpace.SMEM),
        ],
        out_specs=(pl.BlockSpec((bt, Cout, Hp), lambda i: (i, 0, 0)),
                   pl.BlockSpec((bt, Cout, Hp), lambda i: (i, 0, 0))),
        compiler_params=pltpu.CompilerParams(
            dimension_semantics=("parallel",),
            vmem_limit_bytes=32 * 1024 * 1024),
    )(x1b, x2e, x2o, params["w_up"], params["w_c"],
      params["shift1"], params["shift2"], params["alphas"])

    # Interleave even/odd output positions (pure layout; one fused XLA pass).
    out = jnp.stack([oe, oo], axis=-1).reshape(B, Cout, 2 * Hp)
    return out[:, :, :L2]


def init_params(key, in_ch, out_ch):
    half = in_ch // 2
    eps = 1e-5
    k = jax.random.split(key, 4)
    s_bn = 1.0 / jnp.sqrt(1.0 + eps)    # BatchNorm1d eval-mode (fresh running stats)

    # Deconv1D: ConvTranspose1d(in_ch, half, 3, 2, 1), xavier_uniform; torch weight (in_ch, half, 3).
    bound = (6.0 / (half * 3 + in_ch * 3)) ** 0.5
    w_up = jax.random.uniform(k[0], (in_ch, half, 3), jnp.float32, -bound, bound)
    b_up = jax.random.uniform(k[1], (half,), jnp.float32, -0.1, 0.1)
    w0, w1, w2 = (s_bn * w_up[:, :, t].T for t in range(3))   # (half, in_ch), BN scale folded
    zeros = jnp.zeros_like(w1)
    w_up_comb = jnp.concatenate(
        [jnp.concatenate([w1, zeros], axis=1),   # even outputs: tap1 @ x[m]
         jnp.concatenate([w2, w0], axis=1)],     # odd outputs:  tap2 @ x[m] + tap0 @ x[m+1]
        axis=0).astype(jnp.bfloat16)             # (2*half, 2*in_ch)
    shift1 = jnp.tile((s_bn * b_up).reshape(half, 1), (2, 1))  # (2*half, 1)

    # Conv1D: Conv1d(in_ch, out_ch, 3, 1, 1), weight_norm (identity reparam at init), xavier_uniform.
    bound2 = (6.0 / (in_ch * 3 + out_ch * 3)) ** 0.5
    v = jax.random.uniform(k[2], (out_ch, in_ch, 3), jnp.float32, -bound2, bound2)
    g = jnp.sqrt(jnp.sum(v * v, axis=(1, 2), keepdims=True))
    w_c_raw = g * v / g
    b_c = jax.random.uniform(k[3], (out_ch,), jnp.float32, -0.1, 0.1)
    w_c = jnp.concatenate([s_bn * w_c_raw[:, :, t] for t in range(3)],
                          axis=1).astype(jnp.bfloat16)         # (out_ch, 3*in_ch)
    shift2 = (s_bn * b_c).reshape(out_ch, 1)

    return {
        "w_up": w_up_comb, "shift1": shift1,
        "w_c": w_c, "shift2": shift2,
        "alphas": jnp.array([0.25, 0.25], jnp.float32),        # PReLU init
        # raw f32 weights, used only by the pure-JAX reference check
        "raw_w_up": w_up, "raw_b_up": b_up,
        "raw_w_c": w_c_raw, "raw_b_c": b_c,
    }


def up_reference(x1, x2, params):
    """Direct f32 implementation of the PyTorch module (correctness check only)."""
    w_up, b_up = params["raw_w_up"], params["raw_b_up"]       # (Cin, half, 3), (half,)
    w_c, b_c = params["raw_w_c"], params["raw_b_c"]           # (Cout, Cin, 3), (Cout,)
    s_bn = 1.0 / jnp.sqrt(1.0 + 1e-5)
    B, Cin, L1 = x1.shape
    half = w_up.shape[1]
    Cout = w_c.shape[0]
    L2 = x2.shape[2]
    Lu = 2 * L1 - 1

    y = jnp.zeros((B, half, Lu), jnp.float32)
    for m in range(L1):
        for t in range(3):
            o = 2 * m + t - 1
            if 0 <= o < Lu:
                y = y.at[:, :, o].add(jnp.einsum("bc,ch->bh", x1[:, :, m], w_up[:, :, t]))
    y = s_bn * (y + b_up[None, :, None])
    y = jnp.where(y >= 0, y, 0.25 * y)

    diff = L2 - Lu
    dl = diff // 2
    u = jnp.zeros((B, half, L2), jnp.float32)
    for p in range(L2):
        q = p - dl
        if 0 <= q < Lu:
            u = u.at[:, :, p].set(y[:, :, q])
    z = jnp.concatenate([x2, u], axis=1)

    out = jnp.zeros((B, Cout, L2), jnp.float32)
    for p in range(L2):
        for t in range(3):
            q = p + t - 1
            if 0 <= q < L2:
                out = out.at[:, :, p].add(jnp.einsum("bc,oc->bo", z[:, :, q], w_c[:, :, t]))
    out = s_bn * (out + b_c[None, :, None])
    return jnp.where(out >= 0, out, 0.25 * out)


if __name__ == "__main__":
    key = jax.random.PRNGKey(0)
    B, in_ch, out_ch, L1, L2 = 2, 8, 4, 8, 16
    kp, kx1, kx2 = jax.random.split(key, 3)

    params = init_params(kp, in_ch, out_ch)
    x1 = jax.random.normal(kx1, (B, in_ch, L1), jnp.float32)          # Up's x1
    x2 = jax.random.normal(kx2, (B, in_ch // 2, L2), jnp.float32)     # skip connection

    out = jax.jit(functools.partial(up_forward, params=params))(x1, x2)
    jax.block_until_ready(out)
    assert out.shape == (B, out_ch, L2), out.shape
    assert bool(jnp.all(jnp.isfinite(out)))

    ref = up_reference(x1, x2, params)
    err = float(jnp.max(jnp.abs(out - ref)))
    assert err < 0.25, f"max abs error vs f32 reference: {err}"     # bf16 matmul tolerance
    print("KERNEL_OK")
</pallas_src>

<mosaic_0001>
module attributes {stable_mosaic.version = 11 : i64} {
  func.func @_up_fused_kernel(%arg0: i32, %arg1: memref<1x8x8xbf16, #tpu.memory_space<vmem>>, %arg2: memref<1x4x8xbf16, #tpu.memory_space<vmem>>, %arg3: memref<1x4x8xbf16, #tpu.memory_space<vmem>>, %arg4: memref<8x16xbf16, #tpu.memory_space<vmem>>, %arg5: memref<4x24xbf16, #tpu.memory_space<vmem>>, %arg6: memref<8x1xf32, #tpu.memory_space<vmem>>, %arg7: memref<4x1xf32, #tpu.memory_space<vmem>>, %arg8: memref<2xf32, #tpu.memory_space<smem>>, %arg9: memref<1x4x8xf32, #tpu.memory_space<vmem>>, %arg10: memref<1x4x8xf32, #tpu.memory_space<vmem>>) attributes {dimension_semantics = [#tpu.dimension_semantics<parallel>], iteration_bounds = array<i64: 2>, scalar_prefetch = 0 : i64, scratch_operands = 0 : i64, tpu.core_type = #tpu.core_type<tc>, window_params = [{transform_indices = @transform_0, window_bounds = array<i64: 1, 8, 8>}, {transform_indices = @transform_1, window_bounds = array<i64: 1, 4, 8>}, {transform_indices = @transform_2, window_bounds = array<i64: 1, 4, 8>}, {pipeline_mode = #tpu.pipeline_mode<synchronous>, transform_indices = @transform_3, window_bounds = array<i64: 8, 16>}, {pipeline_mode = #tpu.pipeline_mode<synchronous>, transform_indices = @transform_4, window_bounds = array<i64: 4, 24>}, {pipeline_mode = #tpu.pipeline_mode<synchronous>, transform_indices = @transform_5, window_bounds = array<i64: 8, 1>}, {pipeline_mode = #tpu.pipeline_mode<synchronous>, transform_indices = @transform_6, window_bounds = array<i64: 4, 1>}, {transform_indices = @transform_7, window_bounds = array<i64: 2>}, {transform_indices = @transform_8, window_bounds = array<i64: 1, 4, 8>}, {transform_indices = @transform_9, window_bounds = array<i64: 1, 4, 8>}]} {
    %c0 = arith.constant 0 : index
    %0 = memref.load %arg8[%c0] : memref<2xf32, #tpu.memory_space<smem>>
    %c1 = arith.constant 1 : index
    %1 = memref.load %arg8[%c1] : memref<2xf32, #tpu.memory_space<smem>>
    %c0_0 = arith.constant 0 : index
    %c0_1 = arith.constant 0 : index
    %c0_2 = arith.constant 0 : index
    %2 = vector.load %arg1[%c0_0, %c0_1, %c0_2] : memref<1x8x8xbf16, #tpu.memory_space<vmem>>, vector<1x8x8xbf16>
    %3 = vector.shape_cast %2 : vector<1x8x8xbf16> to vector<8x8xbf16>
    %cst = arith.constant 0.000000e+00 : bf16
    %4 = vector.broadcast %cst : bf16 to vector<8x1xbf16>
    %5 = vector.extract_strided_slice %3 {offsets = [0, 1], sizes = [8, 7], strides = [1, 1]} : vector<8x8xbf16> to vector<8x7xbf16>
    %6 = tpu.concatenate %5, %4 in 1 : vector<8x7xbf16>, vector<8x1xbf16> -> vector<8x8xbf16>
    %7 = tpu.concatenate %3, %6 in 0 : vector<8x8xbf16>, vector<8x8xbf16> -> vector<16x8xbf16>
    %c0_3 = arith.constant 0 : index
    %c0_4 = arith.constant 0 : index
    %8 = vector.load %arg4[%c0_3, %c0_4] : memref<8x16xbf16, #tpu.memory_space<vmem>>, vector<8x16xbf16>
    %cst_5 = arith.constant dense<0.000000e+00> : vector<8x8xf32>
    %9 = tpu.matmul %8, %7, %cst_5 {dimension_numbers = #tpu.dot_dimension_numbers<[1], [0], [0], [1], [0, 0, 1, 1], [], []>} : vector<8x16xbf16>, vector<16x8xbf16>, vector<8x8xf32> -> vector<8x8xf32>
    %c0_6 = arith.constant 0 : index
    %c0_7 = arith.constant 0 : index
    %10 = vector.load %arg6[%c0_6, %c0_7] : memref<8x1xf32, #tpu.memory_space<vmem>>, vector<8x1xf32>
    %11 = vector.broadcast %10 : vector<8x1xf32> to vector<8x8xf32>
    %12 = arith.addf %9, %11 : vector<8x8xf32>
    %cst_8 = arith.constant 0.000000e+00 : f32
    %13 = vector.broadcast %cst_8 : f32 to vector<8x8xf32>
    %14 = arith.cmpf oge, %12, %13 : vector<8x8xf32>
    %15 = vector.broadcast %0 : f32 to vector<8x8xf32>
    %16 = arith.mulf %15, %12 : vector<8x8xf32>
    %17 = arith.select %14, %12, %16 : vector<8x8xi1>, vector<8x8xf32>
    %18 = tpu.iota {dimensions = array<i32: 1>} : vector<4x8xi32>
    %19 = vector.extract_strided_slice %17 {offsets = [0, 0], sizes = [4, 8], strides = [1, 1]} : vector<8x8xf32> to vector<4x8xf32>
    %20 = vector.extract_strided_slice %17 {offsets = [4, 0], sizes = [4, 8], strides = [1, 1]} : vector<8x8xf32> to vector<4x8xf32>
    %c7_i32 = arith.constant 7 : i32
    %21 = vector.broadcast %c7_i32 : i32 to vector<4x8xi32>
    %22 = arith.cmpi eq, %18, %21 : vector<4x8xi32>
    %cst_9 = arith.constant 0.000000e+00 : f32
    %23 = vector.broadcast %cst_9 : f32 to vector<4x8xf32>
    %24 = arith.select %22, %23, %20 : vector<4x8xi1>, vector<4x8xf32>
    %c0_10 = arith.constant 0 : index
    %c0_11 = arith.constant 0 : index
    %c0_12 = arith.constant 0 : index
    %25 = vector.load %arg2[%c0_10, %c0_11, %c0_12] : memref<1x4x8xbf16, #tpu.memory_space<vmem>>, vector<1x4x8xbf16>
    %26 = vector.shape_cast %25 : vector<1x4x8xbf16> to vector<4x8xbf16>
    %27 = arith.truncf %19 : vector<4x8xf32> to vector<4x8xbf16>
    %28 = tpu.concatenate %26, %27 in 0 : vector<4x8xbf16>, vector<4x8xbf16> -> vector<8x8xbf16>
    %c0_13 = arith.constant 0 : index
    %c0_14 = arith.constant 0 : index
    %c0_15 = arith.constant 0 : index
    %29 = vector.load %arg3[%c0_13, %c0_14, %c0_15] : memref<1x4x8xbf16, #tpu.memory_space<vmem>>, vector<1x4x8xbf16>
    %30 = vector.shape_cast %29 : vector<1x4x8xbf16> to vector<4x8xbf16>
    %31 = arith.truncf %24 : vector<4x8xf32> to vector<4x8xbf16>
    %32 = tpu.concatenate %30, %31 in 0 : vector<4x8xbf16>, vector<4x8xbf16> -> vector<8x8xbf16>
    %cst_16 = arith.constant 0.000000e+00 : bf16
    %33 = vector.broadcast %cst_16 : bf16 to vector<8x1xbf16>
    %34 = vector.extract_strided_slice %32 {offsets = [0, 0], sizes = [8, 7], strides = [1, 1]} : vector<8x8xbf16> to vector<8x7xbf16>
    %35 = tpu.concatenate %33, %34 in 1 : vector<8x1xbf16>, vector<8x7xbf16> -> vector<8x8xbf16>
    %cst_17 = arith.constant 0.000000e+00 : bf16
    %36 = vector.broadcast %cst_17 : bf16 to vector<8x1xbf16>
    %37 = vector.extract_strided_slice %28 {offsets = [0, 1], sizes = [8, 7], strides = [1, 1]} : vector<8x8xbf16> to vector<8x7xbf16>
    %38 = tpu.concatenate %37, %36 in 1 : vector<8x7xbf16>, vector<8x1xbf16> -> vector<8x8xbf16>
    %39 = tpu.concatenate %35, %28, %32 in 0 : vector<8x8xbf16>, vector<8x8xbf16>, vector<8x8xbf16> -> vector<24x8xbf16>
    %40 = tpu.concatenate %28, %32, %38 in 0 : vector<8x8xbf16>, vector<8x8xbf16>, vector<8x8xbf16> -> vector<24x8xbf16>
    %c0_18 = arith.constant 0 : index
    %c0_19 = arith.constant 0 : index
    %41 = vector.load %arg5[%c0_18, %c0_19] : memref<4x24xbf16, #tpu.memory_space<vmem>>, vector<4x24xbf16>
    %cst_20 = arith.constant dense<0.000000e+00> : vector<4x8xf32>
    %42 = tpu.matmul %41, %39, %cst_20 {dimension_numbers = #tpu.dot_dimension_numbers<[1], [0], [0], [1], [0, 0, 1, 1], [], []>} : vector<4x24xbf16>, vector<24x8xbf16>, vector<4x8xf32> -> vector<4x8xf32>
    %c0_21 = arith.constant 0 : index
    %c0_22 = arith.constant 0 : index
    %43 = vector.load %arg7[%c0_21, %c0_22] : memref<4x1xf32, #tpu.memory_space<vmem>>, vector<4x1xf32>
    %44 = vector.broadcast %43 : vector<4x1xf32> to vector<4x8xf32>
    %45 = arith.addf %42, %44 : vector<4x8xf32>
    %cst_23 = arith.constant dense<0.000000e+00> : vector<4x8xf32>
    %46 = tpu.matmul %41, %40, %cst_23 {dimension_numbers = #tpu.dot_dimension_numbers<[1], [0], [0], [1], [0, 0, 1, 1], [], []>} : vector<4x24xbf16>, vector<24x8xbf16>, vector<4x8xf32> -> vector<4x8xf32>
    %c0_24 = arith.constant 0 : index
    %c0_25 = arith.constant 0 : index
    %47 = vector.load %arg7[%c0_24, %c0_25] : memref<4x1xf32, #tpu.memory_space<vmem>>, vector<4x1xf32>
    %48 = vector.broadcast %47 : vector<4x1xf32> to vector<4x8xf32>
    %49 = arith.addf %46, %48 : vector<4x8xf32>
    %cst_26 = arith.constant 0.000000e+00 : f32
    %50 = vector.broadcast %cst_26 : f32 to vector<4x8xf32>
    %51 = arith.cmpf oge, %45, %50 : vector<4x8xf32>
    %52 = vector.broadcast %1 : f32 to vector<4x8xf32>
    %53 = arith.mulf %52, %45 : vector<4x8xf32>
    %54 = arith.select %51, %45, %53 : vector<4x8xi1>, vector<4x8xf32>
    %cst_27 = arith.constant 0.000000e+00 : f32
    %55 = vector.broadcast %cst_27 : f32 to vector<4x8xf32>
    %56 = arith.cmpf oge, %49, %55 : vector<4x8xf32>
    %57 = vector.broadcast %1 : f32 to vector<4x8xf32>
    %58 = arith.mulf %57, %49 : vector<4x8xf32>
    %59 = arith.select %56, %49, %58 : vector<4x8xi1>, vector<4x8xf32>
    %c0_28 = arith.constant 0 : index
    %c0_29 = arith.constant 0 : index
    %c0_30 = arith.constant 0 : index
    %60 = vector.load %arg9[%c0_28, %c0_29, %c0_30] : memref<1x4x8xf32, #tpu.memory_space<vmem>>, vector<1x4x8xf32>
    %61 = vector.shape_cast %60 : vector<1x4x8xf32> to vector<4x8xf32>
    %62 = vector.shape_cast %54 : vector<4x8xf32> to vector<1x4x8xf32>
    tpu.vector_store %arg9[%c0_28, %c0_29, %c0_30], %62 {strides = array<i32>} : memref<1x4x8xf32, #tpu.memory_space<vmem>>, vector<1x4x8xf32>,
    %c0_31 = arith.constant 0 : index
    %c0_32 = arith.constant 0 : index
    %c0_33 = arith.constant 0 : index
    %63 = vector.load %arg10[%c0_31, %c0_32, %c0_33] : memref<1x4x8xf32, #tpu.memory_space<vmem>>, vector<1x4x8xf32>
    %64 = vector.shape_cast %63 : vector<1x4x8xf32> to vector<4x8xf32>
    %65 = vector.shape_cast %59 : vector<4x8xf32> to vector<1x4x8xf32>
    tpu.vector_store %arg10[%c0_31, %c0_32, %c0_33], %65 {strides = array<i32>} : memref<1x4x8xf32, #tpu.memory_space<vmem>>, vector<1x4x8xf32>,
    return
  }
  func.func @transform_0(%arg0: i32) -> (i32, i32, i32) {
    %c0_i32 = arith.constant 0 : i32
    %c0_i32_0 = arith.constant 0 : i32
    %c0_i32_1 = arith.constant 0 : i32
    return %arg0, %c0_i32, %c0_i32_0 : i32, i32, i32
  }
  func.func @transform_1(%arg0: i32) -> (i32, i32, i32) {
    %c0_i32 = arith.constant 0 : i32
    %c0_i32_0 = arith.constant 0 : i32
    %c0_i32_1 = arith.constant 0 : i32
    return %arg0, %c0_i32, %c0_i32_0 : i32, i32, i32
  }
  func.func @transform_2(%arg0: i32) -> (i32, i32, i32) {
    %c0_i32 = arith.constant 0 : i32
    %c0_i32_0 = arith.constant 0 : i32
    %c0_i32_1 = arith.constant 0 : i32
    return %arg0, %c0_i32, %c0_i32_0 : i32, i32, i32
  }
  func.func @transform_3(%arg0: i32) -> (i32, i32) {
    %c0_i32 = arith.constant 0 : i32
    %c0_i32_0 = arith.constant 0 : i32
    %c0_i32_1 = arith.constant 0 : i32
    return %c0_i32, %c0_i32_0 : i32, i32
  }
  func.func @transform_4(%arg0: i32) -> (i32, i32) {
    %c0_i32 = arith.constant 0 : i32
    %c0_i32_0 = arith.constant 0 : i32
    %c0_i32_1 = arith.constant 0 : i32
    return %c0_i32, %c0_i32_0 : i32, i32
  }
  func.func @transform_5(%arg0: i32) -> (i32, i32) {
    %c0_i32 = arith.constant 0 : i32
    %c0_i32_0 = arith.constant 0 : i32
    %c0_i32_1 = arith.constant 0 : i32
    return %c0_i32, %c0_i32_0 : i32, i32
  }
  func.func @transform_6(%arg0: i32) -> (i32, i32) {
    %c0_i32 = arith.constant 0 : i32
    %c0_i32_0 = arith.constant 0 : i32
    %c0_i32_1 = arith.constant 0 : i32
    return %c0_i32, %c0_i32_0 : i32, i32
  }
  func.func @transform_7(%arg0: i32) -> i32 {
    %c0_i32 = arith.constant 0 : i32
    %c0_i32_0 = arith.constant 0 : i32
    return %c0_i32 : i32
  }
  func.func @transform_8(%arg0: i32) -> (i32, i32, i32) {
    %c0_i32 = arith.constant 0 : i32
    %c0_i32_0 = arith.constant 0 : i32
    %c0_i32_1 = arith.constant 0 : i32
    return %arg0, %c0_i32, %c0_i32_0 : i32, i32, i32
  }
  func.func @transform_9(%arg0: i32) -> (i32, i32, i32) {
    %c0_i32 = arith.constant 0 : i32
    %c0_i32_0 = arith.constant 0 : i32
    %c0_i32_1 = arith.constant 0 : i32
    return %arg0, %c0_i32, %c0_i32_0 : i32, i32, i32
  }
}

</mosaic_0001>

<llo_original>
// kernel: up_forward.1
$region0: #{up_forward.1}
  #allocation0 [shape = 'u32[]', space=smem, size = 0x4, offset = 0x4, fixed_abs, tag = 'smem constant byte address 0x4 - core index']
  #allocation1 [shape = 'u32[144,128]{1,0:T(1,128)}', space=vmem, size = 0x12000, scoped, tag = 'internal scratch']
  %s0 = inlined_call_operand.vmem [shape: bf16[2,8,8], index: 0, kind: input, shape index: {}]
  %s1 = inlined_call_operand.vmem [shape: bf16[2,4,8], index: 1, kind: input, shape index: {}]
  %s2 = inlined_call_operand.vmem [shape: bf16[2,4,8], index: 2, kind: input, shape index: {}]
  %s3 = inlined_call_operand.vmem [shape: bf16[8,16], index: 3, kind: input, shape index: {}]
  %s4 = inlined_call_operand.vmem [shape: bf16[4,24], index: 4, kind: input, shape index: {}]
  %s5 = inlined_call_operand.vmem [shape: f32[8,1], index: 5, kind: input, shape index: {}]
  %s6 = inlined_call_operand.vmem [shape: f32[4,1], index: 6, kind: input, shape index: {}]
  %s7 = inlined_call_operand.vmem [shape: f32[2], index: 7, kind: input, shape index: {}]
  %s8 = inlined_call_operand.vmem [shape: f32[2,4,8], index: 8, kind: output, shape index: {0}]
  %s9 = inlined_call_operand.vmem [shape: f32[2,4,8], index: 9, kind: output, shape index: {1}]
  %10 = xla_tuple %s8, %s9
  %s11 = sld [smem:[#allocation0]]
  $region77: #{up_forward.1} parent=0
    _
  %s13 = ssub.s32 1, %s11
  %s14 = scalar_select 0, %s13, %s11
  $region1: #{up_forward.1} parent=0
    #allocation2 [shape = 'u8[512]{0}', space=smem, size = 0x200, scoped, tag = 'input window, operand 7, single buffered']
    #allocation3 [shape = 's32[2]{0}', space=sflag, size = 0x8, scoped, tag = 'scoped memory for up_forward.1']
    %15 = vsyncpa [#allocation3], 0
    loop: start=0, step=1, limit=4
    $region2: #{up_forward.1} parent=1 // loop_pre_header
      _
    $region3: #{up_forward.1} parent=1 // loop_header
      %s17 = sphi 0, %s21
      %p18 = scmp.ge.s32.totalorder %s17, 4
      %s27 = sphi 0, %s29
      %s30 = sphi 0, %s27
      %s31 = sphi 0, %s30
      %s47 = sphi 0, %s31
      %s53 = sphi 0, %s55
      %s56 = sphi 0, %s53
      %s57 = sphi 0, %s56
      %s73 = sphi 0, %s57
      %s79 = sphi 0, %s81
      %s82 = sphi 0, %s79
      %s83 = sphi 0, %s82
      %s99 = sphi 0, %s83
      %s103 = sphi 0, %s103
      %s105 = sphi 0, %s103
      %s106 = sphi 0, %s105
      %s120 = sphi 0, %s106
      %s124 = sphi 0, %s124
      %s126 = sphi 0, %s124
      %s127 = sphi 0, %s126
      %s141 = sphi 0, %s127
      %s145 = sphi 0, %s145
      %s147 = sphi 0, %s145
      %s148 = sphi 0, %s147
      %s162 = sphi 0, %s148
      %s166 = sphi 0, %s166
      %s168 = sphi 0, %s166
      %s169 = sphi 0, %s168
      %s183 = sphi 0, %s169
      %s187 = sphi 0, %s187
      %s189 = sphi 0, %s187
      %s190 = sphi 0, %s189
      %s204 = sphi 0, %s190
      %s210 = sphi 0, %s212
      %s213 = sphi 0, %s210
      %s214 = sphi 0, %s213
      %s230 = sphi 0, %s214
      %s236 = sphi 0, %s238
      %s239 = sphi 0, %s236
      %s240 = sphi 0, %s239
      %s256 = sphi 0, %s240
    $region4: #{up_forward.1} parent=1 // loop_header_branch
      %20 = sbr.rel (%p18) target = $region8
    $region5: #{up_forward.1} parent=1 // loop_body
      %s22 = ssub.s32 %s17, 1
      %s23 = ssub.s32 %s17, 2
      %s24 = sadd.s32 %s17, 1
      %s25 = ssub.s32 %s17, %s24
      %p26 = scmp.eq.s32.totalorder %s25, 0
      %s28 = sadd.s32 %s27, 1
      %s29 = scalar_select %p26, %s27, %s28
      %p32 = pneg %p26
      %p33 = scmp.eq.s32.totalorder %s17, 1
      %p34 = por %p32, %p33
      %p35 = scmp.ne.s32.totalorder %s27, %s30
      %p36 = scmp.eq.s32.totalorder %s17, 0
      %p37 = por %p35, %p36
      %p38 = scmp.ne.s32.totalorder %s27, %s30
      %p39 = scmp.eq.s32.totalorder %s22, 1
      %p40 = por %p38, %p39
      %p41 = scmp.ne.s32.totalorder %s30, %s31
      %p42 = scmp.eq.s32.totalorder %s22, 0
      %p43 = por %p41, %p42
      %p44 = scmp.ne.s32.totalorder %s30, %s31
      %p45 = scmp.eq.s32.totalorder %s23, 1
      %p46 = por %p44, %p45
      %p48 = scmp.ne.s32.totalorder %s31, %s47
      %p49 = scmp.eq.s32.totalorder %s23, 0
      %p50 = por %p48, %p49
      %s51 = ssub.s32 %s17, %s24
      %p52 = scmp.eq.s32.totalorder %s51, 0
      %s54 = sadd.s32 %s53, 1
      %s55 = scalar_select %p52, %s53, %s54
      %p58 = pneg %p52
      %p59 = scmp.eq.s32.totalorder %s17, 1
      %p60 = por %p58, %p59
      %p61 = scmp.ne.s32.totalorder %s53, %s56
      %p62 = scmp.eq.s32.totalorder %s17, 0
      %p63 = por %p61, %p62
      %p64 = scmp.ne.s32.totalorder %s53, %s56
      %p65 = scmp.eq.s32.totalorder %s22, 1
      %p66 = por %p64, %p65
      %p67 = scmp.ne.s32.totalorder %s56, %s57
      %p68 = scmp.eq.s32.totalorder %s22, 0
      %p69 = por %p67, %p68
      %p70 = scmp.ne.s32.totalorder %s56, %s57
      %p71 = scmp.eq.s32.totalorder %s23, 1
      %p72 = por %p70, %p71
      %p74 = scmp.ne.s32.totalorder %s57, %s73
      %p75 = scmp.eq.s32.totalorder %s23, 0
      %p76 = por %p74, %p75
      %s77 = ssub.s32 %s17, %s24
      %p78 = scmp.eq.s32.totalorder %s77, 0
      %s80 = sadd.s32 %s79, 1
      %s81 = scalar_select %p78, %s79, %s80
      %p84 = pneg %p78
      %p85 = scmp.eq.s32.totalorder %s17, 1
      %p86 = por %p84, %p85
      %p87 = scmp.ne.s32.totalorder %s79, %s82
      %p88 = scmp.eq.s32.totalorder %s17, 0
      %p89 = por %p87, %p88
      %p90 = scmp.ne.s32.totalorder %s79, %s82
      %p91 = scmp.eq.s32.totalorder %s22, 1
      %p92 = por %p90, %p91
      %p93 = scmp.ne.s32.totalorder %s82, %s83
      %p94 = scmp.eq.s32.totalorder %s22, 0
      %p95 = por %p93, %p94
      %p96 = scmp.ne.s32.totalorder %s82, %s83
      %p97 = scmp.eq.s32.totalorder %s23, 1
      %p98 = por %p96, %p97
      %p100 = scmp.ne.s32.totalorder %s83, %s99
      %p101 = scmp.eq.s32.totalorder %s23, 0
      %p102 = por %p100, %p101
      %s104 = sadd.s32 %s103, 1
      %p107 = scmp.eq.s32.totalorder %s17, 1
      %p108 = scmp.ne.s32.totalorder %s103, %s105
      %p109 = scmp.eq.s32.totalorder %s17, 0
      %p110 = por %p108, %p109
      %p111 = scmp.ne.s32.totalorder %s103, %s105
      %p112 = scmp.eq.s32.totalorder %s22, 1
      %p113 = por %p111, %p112
      %p114 = scmp.ne.s32.totalorder %s105, %s106
      %p115 = scmp.eq.s32.totalorder %s22, 0
      %p116 = por %p114, %p115
      %p117 = scmp.ne.s32.totalorder %s105, %s106
      %p118 = scmp.eq.s32.totalorder %s23, 1
      %p119 = por %p117, %p118
      %p121 = scmp.ne.s32.totalorder %s106, %s120
      %p122 = scmp.eq.s32.totalorder %s23, 0
      %p123 = por %p121, %p122
      %s125 = sadd.s32 %s124, 1
      %p128 = scmp.eq.s32.totalorder %s17, 1
      %p129 = scmp.ne.s32.totalorder %s124, %s126
      %p130 = scmp.eq.s32.totalorder %s17, 0
      %p131 = por %p129, %p130
      %p132 = scmp.ne.s32.totalorder %s124, %s126
      %p133 = scmp.eq.s32.totalorder %s22, 1
      %p134 = por %p132, %p133
      %p135 = scmp.ne.s32.totalorder %s126, %s127
      %p136 = scmp.eq.s32.totalorder %s22, 0
      %p137 = por %p135, %p136
      %p138 = scmp.ne.s32.totalorder %s126, %s127
      %p139 = scmp.eq.s32.totalorder %s23, 1
      %p140 = por %p138, %p139
      %p142 = scmp.ne.s32.totalorder %s127, %s141
      %p143 = scmp.eq.s32.totalorder %s23, 0
      %p144 = por %p142, %p143
      %s146 = sadd.s32 %s145, 1
      %p149 = scmp.eq.s32.totalorder %s17, 1
      %p150 = scmp.ne.s32.totalorder %s145, %s147
      %p151 = scmp.eq.s32.totalorder %s17, 0
      %p152 = por %p150, %p151
      %p153 = scmp.ne.s32.totalorder %s145, %s147
      %p154 = scmp.eq.s32.totalorder %s22, 1
      %p155 = por %p153, %p154
      %p156 = scmp.ne.s32.totalorder %s147, %s148
      %p157 = scmp.eq.s32.totalorder %s22, 0
      %p158 = por %p156, %p157
      %p159 = scmp.ne.s32.totalorder %s147, %s148
      %p160 = scmp.eq.s32.totalorder %s23, 1
      %p161 = por %p159, %p160
      %p163 = scmp.ne.s32.totalorder %s148, %s162
      %p164 = scmp.eq.s32.totalorder %s23, 0
      %p165 = por %p163, %p164
      %s167 = sadd.s32 %s166, 1
      %p170 = scmp.eq.s32.totalorder %s17, 1
      %p171 = scmp.ne.s32.totalorder %s166, %s168
      %p172 = scmp.eq.s32.totalorder %s17, 0
      %p173 = por %p171, %p172
      %p174 = scmp.ne.s32.totalorder %s166, %s168
      %p175 = scmp.eq.s32.totalorder %s22, 1
      %p176 = por %p174, %p175
      %p177 = scmp.ne.s32.totalorder %s168, %s169
      %p178 = scmp.eq.s32.totalorder %s22, 0
      %p179 = por %p177, %p178
      %p180 = scmp.ne.s32.totalorder %s168, %s169
      %p181 = scmp.eq.s32.totalorder %s23, 1
      %p182 = por %p180, %p181
      %p184 = scmp.ne.s32.totalorder %s169, %s183
      %p185 = scmp.eq.s32.totalorder %s23, 0
      %p186 = por %p184, %p185
      %s188 = sadd.s32 %s187, 1
      %p191 = scmp.eq.s32.totalorder %s17, 1
      %p192 = scmp.ne.s32.totalorder %s187, %s189
      %p193 = scmp.eq.s32.totalorder %s17, 0
      %p194 = por %p192, %p193
      %p195 = scmp.ne.s32.totalorder %s187, %s189
      %p196 = scmp.eq.s32.totalorder %s22, 1
      %p197 = por %p195, %p196
      %p198 = scmp.ne.s32.totalorder %s189, %s190
      %p199 = scmp.eq.s32.totalorder %s22, 0
      %p200 = por %p198, %p199
      %p201 = scmp.ne.s32.totalorder %s189, %s190
      %p202 = scmp.eq.s32.totalorder %s23, 1
      %p203 = por %p201, %p202
      %p205 = scmp.ne.s32.totalorder %s190, %s204
      %p206 = scmp.eq.s32.totalorder %s23, 0
      %p207 = por %p205, %p206
      %s208 = ssub.s32 %s17, %s24
      %p209 = scmp.eq.s32.totalorder %s208, 0
      %s211 = sadd.s32 %s210, 1
      %s212 = scalar_select %p209, %s210, %s211
      %p215 = pneg %p209
      %p216 = scmp.eq.s32.totalorder %s17, 1
      %p217 = por %p215, %p216
      %p218 = scmp.ne.s32.totalorder %s210, %s213
      %p219 = scmp.eq.s32.totalorder %s17, 0
      %p220 = por %p218, %p219
      %p221 = scmp.ne.s32.totalorder %s210, %s213
      %p222 = scmp.eq.s32.totalorder %s22, 1
      %p223 = por %p221, %p222
      %p224 = scmp.ne.s32.totalorder %s213, %s214
      %p225 = scmp.eq.s32.totalorder %s22, 0
      %p226 = por %p224, %p225
      %p227 = scmp.ne.s32.totalorder %s213, %s214
      %p228 = scmp.eq.s32.totalorder %s23, 1
      %p229 = por %p227, %p228
      %p231 = scmp.ne.s32.totalorder %s214, %s230
      %p232 = scmp.eq.s32.totalorder %s23, 0
      %p233 = por %p231, %p232
      %s234 = ssub.s32 %s17, %s24
      %p235 = scmp.eq.s32.totalorder %s234, 0
      %s237 = sadd.s32 %s236, 1
      %s238 = scalar_select %p235, %s236, %s237
      %p241 = pneg %p235
      %p242 = scmp.eq.s32.totalorder %s17, 1
      %p243 = por %p241, %p242
      %p244 = scmp.ne.s32.totalorder %s236, %s239
      %p245 = scmp.eq.s32.totalorder %s17, 0
      %p246 = por %p244, %p245
      %p247 = scmp.ne.s32.totalorder %s236, %s239
      %p248 = scmp.eq.s32.totalorder %s22, 1
      %p249 = por %p247, %p248
      %p250 = scmp.ne.s32.totalorder %s239, %s240
      %p251 = scmp.eq.s32.totalorder %s22, 0
      %p252 = por %p250, %p251
      %p253 = scmp.ne.s32.totalorder %s239, %s240
      %p254 = scmp.eq.s32.totalorder %s23, 1
      %p255 = por %p253, %p254
      %p257 = scmp.ne.s32.totalorder %s240, %s256
      %p258 = scmp.eq.s32.totalorder %s23, 0
      %p259 = por %p257, %p258
      %p260 = scmp.le.s32.totalorder 1, %s17
      %p261 = scmp.lt.s32.totalorder %s17, 3
      %p262 = pnand %p260, %p261
      %p263 = pneg %p262
      // Predicated region
      $region9: #{up_forward.1} parent=5 // pred_check
        _
      $region10: #{up_forward.1} parent=5 // pred_check_branch
        %265 = sbr.rel (%p262) target = $region12
      $region11: #{up_forward.1} parent=5 // pred_region
        %s266 = ssub.s32 %s17, 1
        // Predicated region
        $region13: #{up_forward.1} parent=11 // pred_check
          %p267 = pneg %p116
        $region14: #{up_forward.1} parent=11 // pred_check_branch
          %269 = sbr.rel (%p267) target = $region16
        $region15: #{up_forward.1} parent=11 // pred_region
          _
        $region16: #{up_forward.1} parent=11 // pred_fallthru
          _
        // Predicated region
        $region17: #{up_forward.1} parent=11 // pred_check
          %p270 = pneg %p137
        $region18: #{up_forward.1} parent=11 // pred_check_branch
          %272 = sbr.rel (%p270) target = $region20
        $region19: #{up_forward.1} parent=11 // pred_region
          _
        $region20: #{up_forward.1} parent=11 // pred_fallthru
          _
        // Predicated region
        $region21: #{up_forward.1} parent=11 // pred_check
          %p273 = pneg %p158
        $region22: #{up_forward.1} parent=11 // pred_check_branch
          %275 = sbr.rel (%p273) target = $region24
        $region23: #{up_forward.1} parent=11 // pred_region
          _
        $region24: #{up_forward.1} parent=11 // pred_fallthru
          _
        // Predicated region
        $region25: #{up_forward.1} parent=11 // pred_check
          %p276 = pneg %p179
        $region26: #{up_forward.1} parent=11 // pred_check_branch
          %278 = sbr.rel (%p276) target = $region28
        $region27: #{up_forward.1} parent=11 // pred_region
          _
        $region28: #{up_forward.1} parent=11 // pred_fallthru
          _
        // Predicated region
        $region29: #{up_forward.1} parent=11 // pred_check
          %p279 = pneg %p200
        $region30: #{up_forward.1} parent=11 // pred_check_branch
          %281 = sbr.rel (%p279) target = $region32
        $region31: #{up_forward.1} parent=11 // pred_region
          %s283 = ssub.s32 16, 16
          %284 = vsyncadd [#allocation3], %s283
          %s286 = sshll.u32 %s7, 4
          %s287 = int_to_ptr.vmem [resolvable:$true] %s286
          %289 = dma.vmem_to_smem %s287, 16, [#allocation2], [#allocation3]
        $region32: #{up_forward.1} parent=11 // pred_fallthru
          _
      $region12: #{up_forward.1} parent=5 // pred_fallthru
        _
      %p290 = scmp.lt.s32.totalorder %s17, 2
      // Predicated region
      $region33: #{up_forward.1} parent=5 // pred_check
        %p291 = pneg %p290
      $region34: #{up_forward.1} parent=5 // pred_check_branch
        %293 = sbr.rel (%p291) target = $region36
      $region35: #{up_forward.1} parent=5 // pred_region
        // Predicated region
        $region37: #{up_forward.1} parent=35 // pred_check
          %p294 = pneg %p37
        $region38: #{up_forward.1} parent=35 // pred_check_branch
          %296 = sbr.rel (%p294) target = $region40
        $region39: #{up_forward.1} parent=35 // pred_region
          %p297 = scmp.lt.s32.totalorder %s17, 1
          %s298 = scalar_select %p297, %s17, 1
          %s299 = smul.addr %s298, 4
          %s300 = scalar_lea.vmem %s0, %s299
        $region40: #{up_forward.1} parent=35 // pred_fallthru
          _
        // Predicated region
        $region41: #{up_forward.1} parent=35 // pred_check
          %p301 = pneg %p63
        $region42: #{up_forward.1} parent=35 // pred_check_branch
          %303 = sbr.rel (%p301) target = $region44
        $region43: #{up_forward.1} parent=35 // pred_region
          %p304 = scmp.lt.s32.totalorder %s17, 1
          %s305 = scalar_select %p304, %s17, 1
          %s306 = smul.addr %s305, 2
          %s307 = scalar_lea.vmem %s1, %s306
        $region44: #{up_forward.1} parent=35 // pred_fallthru
          _
        // Predicated region
        $region45: #{up_forward.1} parent=35 // pred_check
          %p308 = pneg %p89
        $region46: #{up_forward.1} parent=35 // pred_check_branch
          %310 = sbr.rel (%p308) target = $region48
        $region47: #{up_forward.1} parent=35 // pred_region
          %p311 = scmp.lt.s32.totalorder %s17, 1
          %s312 = scalar_select %p311, %s17, 1
          %s313 = smul.addr %s312, 2
          %s314 = scalar_lea.vmem %s2, %s313
        $region48: #{up_forward.1} parent=35 // pred_fallthru
          _
      $region36: #{up_forward.1} parent=5 // pred_fallthru
        _
      %p315 = scmp.le.s32.totalorder 1, %s17
      %p316 = scmp.lt.s32.totalorder %s17, 3
      %p317 = pnand %p315, %p316
      %p318 = pneg %p317
      // Predicated region
      $region49: #{up_forward.1} parent=5 // pred_check
        _
      $region50: #{up_forward.1} parent=5 // pred_check_branch
        %320 = sbr.rel (%p317) target = $region52
      $region51: #{up_forward.1} parent=5 // pred_region
        %s321 = ssub.s32 %s17, 1
        // Predicated region
        $region53: #{up_forward.1} parent=51 // pred_check
          %p322 = pneg %p200
        $region54: #{up_forward.1} parent=51 // pred_check_branch
          %324 = sbr.rel (%p322) target = $region56
        $region55: #{up_forward.1} parent=51 // pred_region
          %325 = dma.done [#allocation3], 16
        $region56: #{up_forward.1} parent=51 // pred_fallthru
          _
        %326 = sfence
        %p327 = scmp.lt.s32.totalorder %s22, 1
        %s328 = scalar_select %p327, %s22, 1
        %s329 = smul.addr %s328, 4
        %s330 = scalar_lea.vmem %s0, %s329
        %p331 = pneg %p43
        %p332 = pneg %p40
        %p333 = scmp.lt.s32.totalorder %s22, 1
        %s334 = scalar_select %p333, %s22, 1
        %s335 = smul.addr %s334, 2
        %s336 = scalar_lea.vmem %s1, %s335
        %p337 = pneg %p69
        %p338 = pneg %p66
        %p339 = scmp.lt.s32.totalorder %s22, 1
        %s340 = scalar_select %p339, %s22, 1
        %s341 = smul.addr %s340, 2
        %s342 = scalar_lea.vmem %s2, %s341
        %p343 = pneg %p95
        %p344 = pneg %p92
        %p345 = pneg %p116
        %p346 = pneg %p113
        %p347 = pneg %p137
        %p348 = pneg %p134
        %p349 = pneg %p158
        %p350 = pneg %p155
        %p351 = pneg %p179
        %p352 = pneg %p176
        %p353 = pneg %p200
        %p354 = pneg %p197
        %p355 = pneg %p226
        %p356 = pneg %p223
        %p357 = scmp.lt.s32.totalorder %s22, 1
        %s358 = scalar_select %p357, %s22, 1
        %s359 = smul.addr %s358, 4
        %s360 = scalar_lea.vmem %s8, %s359
        %p361 = pneg %p252
        %p362 = pneg %p249
        %p363 = scmp.lt.s32.totalorder %s22, 1
        %s364 = scalar_select %p363, %s22, 1
        %s365 = smul.addr %s364, 4
        %s366 = scalar_lea.vmem %s9, %s365
        %p367 = scmp.lt.s32.totalorder %s22, 1
        %s368 = scalar_select %p367, %s22, 1
        %s369 = smul.addr %s368, 4
        %s370 = scalar_lea.vmem %s0, %s369
        %p371 = scmp.lt.s32.totalorder %s22, 1
        %s372 = scalar_select %p371, %s22, 1
        %s373 = smul.addr %s372, 2
        %s374 = scalar_lea.vmem %s1, %s373
        %p375 = scmp.lt.s32.totalorder %s22, 1
        %s376 = scalar_select %p375, %s22, 1
        %s377 = smul.addr %s376, 2
        %s378 = scalar_lea.vmem %s2, %s377
        %p379 = scmp.lt.s32.totalorder %s22, 1
        %s380 = scalar_select %p379, %s22, 1
        %s381 = smul.addr %s380, 4
        %s382 = scalar_lea.vmem %s8, %s381
        %p383 = scmp.lt.s32.totalorder %s22, 1
        %s384 = scalar_select %p383, %s22, 1
        %s385 = smul.addr %s384, 4
        %s386 = scalar_lea.vmem %s9, %s385
        %s388 = sld [smem:[#allocation2]]
        %s389 = sld [smem:[#allocation2 + $0x1]]
        %v390 = vld [vmem:[%s370] sm:$0xf]
        %v392 = vunpack.c.l.b16 %v390
        %v393 = vpack.c.b16 %v392, %v392
        %394 = vrot.lane.b32.xlu0 %v393, 127
        %v395 = vpop.permute.xlu0 %394
        %vm396 = vcmask 56320
        %v399 = vsel %vm396, %v395, 0
        %v401 = vrot.slane %v399, 4
        %vm402 = vcmask 1043456
        %v405 = vsel %vm402, %v390, %v401
        %v407 = vld [vmem:[%s3] sm:$0xf]
        %v408 = vld [vmem:[%s5] sm:$0xff]
        %410 = vset.pattern.permute.xlu0 0
        %411 = vperm.xlu0 %410, %v408
        %v412 = vpop.permute.xlu0 %411
        %vm414 = vcmask 130048
        %v416 = vsel %vm414, %v407, 0
        %418 = vmatprep.subr.bf16.mxu0 0
        %419 = vmatpush1.bf16.msra.mxu0 0
        %420 = vmatprep.subr.bf16.mxu0 0
        %421 = vmatpush1.bf16.msra.mxu0 0
        %422 = vmatprep.subr.bf16.mxu0 0
        %423 = vmatpush1.bf16.msra.mxu0 0
        %424 = vmatprep.subr.bf16.mxu0 0
        %425 = vmatpush1.bf16.msra.mxu0 0
        %426 = vmatprep.subr.bf16.mxu0 0
        %427 = vmatpush1.bf16.msra.mxu0 0
        %428 = vmatprep.subr.bf16.mxu0 0
        %429 = vmatpush1.bf16.msra.mxu0 0
        %430 = vmatprep.subr.bf16.mxu0 0
        %431 = vmatpush1.bf16.msra.mxu0 0
        %432 = vmatprep.subr.bf16.mxu0 0
        %433 = vmatpush1.bf16.msra.mxu0 %v405
        %434 = vmatprep.subr.bf16.mxu0 0
        %435 = vmatpush2.bf16.msra.mxu0 0
        %436 = vmatprep.subr.bf16.mxu0 0
        %437 = vmatpush2.bf16.msra.mxu0 0
        %438 = vmatprep.subr.bf16.mxu0 0
        %439 = vmatpush2.bf16.msra.mxu0 0
        %440 = vmatprep.subr.bf16.mxu0 0
        %441 = vmatpush2.bf16.msra.mxu0 0
        %442 = vmatprep.subr.bf16.mxu0 0
        %443 = vmatpush2.bf16.msra.mxu0 0
        %444 = vmatprep.subr.bf16.mxu0 0
        %445 = vmatpush2.bf16.msra.mxu0 0
        %446 = vmatprep.subr.bf16.mxu0 0
        %447 = vmatpush2.bf16.msra.mxu0 0
        %448 = vmatprep.subr.bf16.mxu0 0
        %449 = vmatpush2.bf16.msra.mxu0 0
        %450 = vmatprep.mubr.bf16.mxu0 0
        %451 = vmatmul.mubr.bf16.gmra.mxu0 %v416
        %v452 = vpop.f32.mrf.mxu0
        %v453 = vadd.f32 %v412, %v452
        %v454 = vpop.f32.mrf.mxu0
        %v455 = vpop.f32.mrf.mxu0
        %v456 = vpop.f32.mrf.mxu0
        %457 = vdwg.mxu0
        %vm458 = vcmp.ge.f32.partialorder %v453, 0.0
        %v459 = vstv %s388
        %v460 = vmul.f32 %v459, %v453
        %v461 = vsel %vm458, %v453, %v460
        %v462 = vlaneseq
        %v463 = vand.u32 %v462, 127
        %vm464 = vcmp.eq.s32.totalorder %v463, 7
        %v465 = vsel %vm464, 0.0, %v461
        %v466 = vld [vmem:[%s374] sm:$0x3]
        %v467 = vpack.c.bf16 %v461, %v461
        %v469 = vrot.slane %v467, 6
        %vm470 = vcmask 1041408
        %v473 = vsel %vm470, %v466, %v469
        %v474 = vld [vmem:[%s378] sm:$0x3]
        %v475 = vpack.c.bf16 %v465, %v465
        %v478 = vsel %vm470, %v474, %v475
        %480 = vrot.lane.b32.xlu0 %v478, 1
        %v481 = vpop.permute.xlu0 %480
        %vm482 = vcmask 7168
        %v484 = vsel %vm482, 0, %v481
        %486 = vrot.lane.b32.xlu0 %v473, 127
        %v487 = vpop.permute.xlu0 %486
        %v489 = vsel %vm396, %v487, 0
        %v490 = vrot.slane %v473, 4
        %v492 = vsel %vm402, %v484, %v490
        %v494 = vrot.slane %v478, 4
        %v496 = vsel %vm402, %v473, %v494
        %v498 = vld [vmem:[%s4] sm:$0x3]
        %v499 = vld [vmem:[%s6] sm:$0xf]
        %501 = vset.pattern.permute.xlu0 0
        %502 = vperm.xlu0 %501, %v499
        %v503 = vpop.permute.xlu0 %502
        %vm505 = vcmask 195584
        %v507 = vsel %vm505, %v498, 0
        %v509 = vsel %vm402, %v478, 0
        %511 = vmatprep.subr.bf16.mxu0 0
        %512 = vmatpush1.bf16.msra.mxu0 0
        %513 = vmatprep.subr.bf16.mxu0 0
        %514 = vmatpush1.bf16.msra.mxu0 0
        %515 = vmatprep.subr.bf16.mxu0 0
        %516 = vmatpush1.bf16.msra.mxu0 0
        %517 = vmatprep.subr.bf16.mxu0 0
        %518 = vmatpush1.bf16.msra.mxu0 0
        %519 = vmatprep.subr.bf16.mxu0 0
        %520 = vmatpush1.bf16.msra.mxu0 0
        %521 = vmatprep.subr.bf16.mxu0 0
        %522 = vmatpush1.bf16.msra.mxu0 0
        %523 = vmatprep.subr.bf16.mxu0 0
        %524 = vmatpush1.bf16.msra.mxu0 %v509
        %525 = vmatprep.subr.bf16.mxu0 0
        %526 = vmatpush1.bf16.msra.mxu0 %v492
        %527 = vmatprep.subr.bf16.mxu0 0
        %528 = vmatpush2.bf16.msra.mxu0 0
        %529 = vmatprep.subr.bf16.mxu0 0
        %530 = vmatpush2.bf16.msra.mxu0 0
        %531 = vmatprep.subr.bf16.mxu0 0
        %532 = vmatpush2.bf16.msra.mxu0 0
        %533 = vmatprep.subr.bf16.mxu0 0
        %534 = vmatpush2.bf16.msra.mxu0 0
        %535 = vmatprep.subr.bf16.mxu0 0
        %536 = vmatpush2.bf16.msra.mxu0 0
        %537 = vmatprep.subr.bf16.mxu0 0
        %538 = vmatpush2.bf16.msra.mxu0 0
        %539 = vmatprep.subr.bf16.mxu0 0
        %540 = vmatpush2.bf16.msra.mxu0 0
        %541 = vmatprep.subr.bf16.mxu0 0
        %542 = vmatpush2.bf16.msra.mxu0 0
        %543 = vmatprep.mubr.bf16.mxu0 0
        %544 = vmatmul.mubr.bf16.gmra.mxu0 %v507
        %v545 = vpop.f32.mrf.mxu0
        %v546 = vadd.f32 %v503, %v545
        %v547 = vpop.f32.mrf.mxu0
        %v548 = vpop.f32.mrf.mxu0
        %v549 = vpop.f32.mrf.mxu0
        %550 = vdwg.mxu0
        %v551 = vsel %vm402, %v489, 0
        %553 = vmatprep.subr.bf16.mxu0 0
        %554 = vmatpush1.bf16.msra.mxu0 0
        %555 = vmatprep.subr.bf16.mxu0 0
        %556 = vmatpush1.bf16.msra.mxu0 0
        %557 = vmatprep.subr.bf16.mxu0 0
        %558 = vmatpush1.bf16.msra.mxu0 0
        %559 = vmatprep.subr.bf16.mxu0 0
        %560 = vmatpush1.bf16.msra.mxu0 0
        %561 = vmatprep.subr.bf16.mxu0 0
        %562 = vmatpush1.bf16.msra.mxu0 0
        %563 = vmatprep.subr.bf16.mxu0 0
        %564 = vmatpush1.bf16.msra.mxu0 0
        %565 = vmatprep.subr.bf16.mxu0 0
        %566 = vmatpush1.bf16.msra.mxu0 %v551
        %567 = vmatprep.subr.bf16.mxu0 0
        %568 = vmatpush1.bf16.msra.mxu0 %v496
        %569 = vmatprep.subr.bf16.mxu0 0
        %570 = vmatpush2.bf16.msra.mxu0 0
        %571 = vmatprep.subr.bf16.mxu0 0
        %572 = vmatpush2.bf16.msra.mxu0 0
        %573 = vmatprep.subr.bf16.mxu0 0
        %574 = vmatpush2.bf16.msra.mxu0 0
        %575 = vmatprep.subr.bf16.mxu0 0
        %576 = vmatpush2.bf16.msra.mxu0 0
        %577 = vmatprep.subr.bf16.mxu0 0
        %578 = vmatpush2.bf16.msra.mxu0 0
        %579 = vmatprep.subr.bf16.mxu0 0
        %580 = vmatpush2.bf16.msra.mxu0 0
        %581 = vmatprep.subr.bf16.mxu0 0
        %582 = vmatpush2.bf16.msra.mxu0 0
        %583 = vmatprep.subr.bf16.mxu0 0
        %584 = vmatpush2.bf16.msra.mxu0 0
        %585 = vmatprep.mubr.bf16.mxu0 0
        %586 = vmatmul.mubr.bf16.gmra.mxu0 %v507
        %v587 = vpop.f32.mrf.mxu0
        %v588 = vadd.f32 %v503, %v587
        %v589 = vpop.f32.mrf.mxu0
        %v590 = vpop.f32.mrf.mxu0
        %v591 = vpop.f32.mrf.mxu0
        %592 = vdwg.mxu0
        %vm593 = vcmp.ge.f32.partialorder %v546, 0.0
        %v594 = vstv %s389
        %v595 = vmul.f32 %v594, %v546
        %v596 = vsel %vm593, %v546, %v595
        %vm597 = vcmp.ge.f32.partialorder %v588, 0.0
        %v598 = vmul.f32 %v594, %v588
        %v599 = vsel %vm597, %v588, %v598
        %vm600 = vcmask 60416
        %601 = vst.msk [vmem:[%s382] sm:$0xf] %vm600, %v596
        %602 = vst.msk [vmem:[%s386] sm:$0xf] %vm600, %v599
        %p603 = scmp.lt.s32.totalorder %s22, 1
        %s604 = scalar_select %p603, %s22, 1
        %s605 = smul.addr %s604, 4
        %s606 = scalar_lea.vmem %s8, %s605
        %p607 = scmp.lt.s32.totalorder %s22, 1
        %s608 = scalar_select %p607, %s22, 1
        %s609 = smul.addr %s608, 4
        %s610 = scalar_lea.vmem %s9, %s609
        // Predicated region
        $region57: #{up_forward.1} parent=51 // pred_check
          %p611 = pneg %p223
        $region58: #{up_forward.1} parent=51 // pred_check_branch
          %613 = sbr.rel (%p611) target = $region60
        $region59: #{up_forward.1} parent=51 // pred_region
          _
        $region60: #{up_forward.1} parent=51 // pred_fallthru
          _
        // Predicated region
        $region61: #{up_forward.1} parent=51 // pred_check
          %p614 = pneg %p249
        $region62: #{up_forward.1} parent=51 // pred_check_branch
          %616 = sbr.rel (%p614) target = $region64
        $region63: #{up_forward.1} parent=51 // pred_region
          _
        $region64: #{up_forward.1} parent=51 // pred_fallthru
          _
      $region52: #{up_forward.1} parent=5 // pred_fallthru
        _
      %p617 = scmp.le.s32.totalorder 2, %s17
      // Predicated region
      $region65: #{up_forward.1} parent=5 // pred_check
        %p618 = pneg %p617
      $region66: #{up_forward.1} parent=5 // pred_check_branch
        %620 = sbr.rel (%p618) target = $region68
      $region67: #{up_forward.1} parent=5 // pred_region
        %s621 = ssub.s32 %s17, 2
        // Predicated region
        $region69: #{up_forward.1} parent=67 // pred_check
          %p622 = pneg %p229
        $region70: #{up_forward.1} parent=67 // pred_check_branch
          %624 = sbr.rel (%p622) target = $region72
        $region71: #{up_forward.1} parent=67 // pred_region
          %p625 = scmp.lt.s32.totalorder %s23, 1
          %s626 = scalar_select %p625, %s23, 1
          %s627 = smul.addr %s626, 4
          %s628 = scalar_lea.vmem %s8, %s627
        $region72: #{up_forward.1} parent=67 // pred_fallthru
          _
        // Predicated region
        $region73: #{up_forward.1} parent=67 // pred_check
          %p629 = pneg %p255
        $region74: #{up_forward.1} parent=67 // pred_check_branch
          %631 = sbr.rel (%p629) target = $region76
        $region75: #{up_forward.1} parent=67 // pred_region
          %p632 = scmp.lt.s32.totalorder %s23, 1
          %s633 = scalar_select %p632, %s23, 1
          %s634 = smul.addr %s633, 4
          %s635 = scalar_lea.vmem %s9, %s634
        $region76: #{up_forward.1} parent=67 // pred_fallthru
          _
      $region68: #{up_forward.1} parent=5 // pred_fallthru
        _
    $region6: #{up_forward.1} parent=1 // loop_footer
      %s21 = sadd.s32 1, %s17
    $region7: #{up_forward.1} parent=1 // loop_footer_branch
      %16 = sbr.rel target = $region3
    $region8: #{up_forward.1} parent=1 // loop_exit
      _
    %636 = vsyncpa [#allocation3], 1
    %s637 = scalar_lea.sflag [#allocation3], 1
    %638 = vsyncpa %s637, 1

</llo_original>
